<compile_context>
chip_gen: v7x
topology: tpu7x:2x2x1
jax: 0.10.0
libtpu: 0.0.40
codegen_flags: <defaults>
</compile_context>

<pallas_src>
import functools

import jax
import jax.numpy as jnp
from jax.experimental import pallas as pl
from jax.experimental.pallas import tpu as pltpu


def _gemm_bn_relu_kernel(a_ref, w_ref, shift_ref, o_ref):
    # a_ref:     (TM, K)    bf16 im2col patch tile
    # w_ref:     (K, Cout)  bf16 conv weight with BN scale folded in (resident)
    # shift_ref: (1, Cout)  f32 folded shift: beta + scale*(conv_bias - mean)
    # o_ref:     (TM, Cout) f32 output tile
    acc = jnp.dot(a_ref[...], w_ref[...], preferred_element_type=jnp.float32)
    o_ref[...] = jnp.maximum(acc + shift_ref[...], 0.0).astype(o_ref.dtype)


def _pick_tile_m(m, k, cout):
    """Largest 8-aligned M tile <= the problem size whose double-buffered
    working set (A tile x2, resident W, out tile x2) stays comfortably under
    the default scoped-VMEM limit (32 MiB on v6e/v7x; v7x physical is 64 MiB).
    Preferring tm <= m also keeps >=2 grid steps for v7x's two TensorCores on
    realistic layer sizes."""
    if m < 8:
        return m
    vmem_budget = 24 * 1024 * 1024
    for tm in (512, 256, 128, 64, 32, 16, 8):
        footprint = 2 * tm * k * 2 + k * cout * 2 + 2 * tm * cout * 4
        if tm <= m and footprint <= vmem_budget:
            return tm
    return 8


@functools.partial(
    jax.jit, static_argnames=("kernel_size", "stride", "padding", "channels_last"))
def basic_conv2d(x, weight, conv_bias, gamma, beta, running_mean, running_var,
                 kernel_size=3, stride=1, padding=0, eps=1e-5,
                 channels_last=False):
    """Forward of BasicConv2d. x: [N, Cin, H, W] (NCHW).
    Returns [N, Cout, Ho, Wo] (or [N, Ho, Wo, Cout] if channels_last=True)."""
    k = kernel_size
    Cout = weight.shape[0]
    N = x.shape[0]

    # ---- glue: im2col patches (bf16) + BN folding (plain JAX, fused by XLA) ----
    patches = jax.lax.conv_general_dilated_patches(
        x.astype(jnp.bfloat16),
        filter_shape=(k, k),
        window_strides=(stride, stride),
        padding=((padding, padding), (padding, padding)),
        dimension_numbers=("NCHW", "OIHW", "NHWC"),
    )                                              # (N, Ho, Wo, Cin*k*k), cin-major
    _, Ho, Wo, K = patches.shape
    M = N * Ho * Wo
    a = patches.reshape(M, K)                      # bf16, true K (no lane padding)

    scale = gamma / jnp.sqrt(running_var + eps)                       # (Cout,)
    w = (weight.reshape(Cout, K).T * scale[None, :]).astype(jnp.bfloat16)  # (K, Cout)
    shift = (beta + scale * (conv_bias - running_mean)).reshape(1, Cout)
    shift = shift.astype(jnp.float32)

    TM = _pick_tile_m(M, K, Cout)

    # ---- hot path: fused GEMM + BN shift + ReLU in Pallas ----
    out = pl.pallas_call(
        _gemm_bn_relu_kernel,
        out_shape=jax.ShapeDtypeStruct((M, Cout), jnp.float32),
        grid_spec=pltpu.PrefetchScalarGridSpec(
            num_scalar_prefetch=0,
            grid=(pl.cdiv(M, TM),),                 # masked tail block, no assert
            in_specs=[
                pl.BlockSpec((TM, K), lambda i: (i, 0)),      # A tile (pipelined)
                pl.BlockSpec((K, Cout), lambda i: (0, 0)),    # weight, resident
                pl.BlockSpec((1, Cout), lambda i: (0, 0)),    # shift, resident
            ],
            out_specs=pl.BlockSpec((TM, Cout), lambda i: (i, 0)),
        ),
        compiler_params=pltpu.CompilerParams(
            dimension_semantics=("parallel",)),
    )(a, w, shift)

    out = out.reshape(N, Ho, Wo, Cout)
    if channels_last:
        return out                                  # no output relayout
    # NCHW for parity with the PyTorch module; NHWC consumers should pass
    # channels_last=True to avoid this whole-output HBM round-trip.
    return out.transpose(0, 3, 1, 2)


def _reference(x, weight, conv_bias, gamma, beta, running_mean, running_var,
               eps=1e-5):
    y = jax.lax.conv_general_dilated(
        x, weight, window_strides=(1, 1), padding="VALID",
        dimension_numbers=("NCHW", "OIHW", "NCHW"),
        precision=jax.lax.Precision.HIGHEST)
    y = y + conv_bias[None, :, None, None]
    y = (y - running_mean[None, :, None, None]) / jnp.sqrt(
        running_var[None, :, None, None] + eps)
    y = gamma[None, :, None, None] * y + beta[None, :, None, None]
    return jnp.maximum(y, 0.0)


if __name__ == "__main__":
    key = jax.random.PRNGKey(0)
    N, Cin, H, W = 2, 4, 16, 16
    Cout, ksz = 8, 3

    k0, k1, k2, k3, k4, k5, k6 = jax.random.split(key, 7)
    x = jax.random.normal(k0, (N, Cin, H, W), jnp.float32)
    weight = jax.random.normal(k1, (Cout, Cin, ksz, ksz), jnp.float32) * 0.1
    conv_bias = jax.random.normal(k2, (Cout,), jnp.float32) * 0.1
    gamma = 1.0 + 0.1 * jax.random.normal(k3, (Cout,), jnp.float32)
    beta = 0.1 * jax.random.normal(k4, (Cout,), jnp.float32)
    running_mean = 0.1 * jax.random.normal(k5, (Cout,), jnp.float32)
    running_var = jnp.abs(1.0 + 0.1 * jax.random.normal(k6, (Cout,), jnp.float32))

    out = basic_conv2d(x, weight, conv_bias, gamma, beta,
                       running_mean, running_var, kernel_size=ksz)
    out = jax.block_until_ready(out)

    ref = _reference(x, weight, conv_bias, gamma, beta,
                     running_mean, running_var)
    assert out.shape == (N, Cout, H - ksz + 1, W - ksz + 1), out.shape
    # bf16 operands (f32 accumulation) -> ~1e-3..1e-2 input-rounding error band.
    assert jnp.allclose(out, ref, atol=3e-2, rtol=3e-2), "mismatch vs reference"

    print("KERNEL_OK")
</pallas_src>

<mosaic_0001>
module attributes {stable_mosaic.version = 11 : i64} {
  func.func @_gemm_bn_relu_kernel(%arg0: i32, %arg1: memref<256x36xbf16, #tpu.memory_space<vmem>>, %arg2: memref<36x8xbf16, #tpu.memory_space<vmem>>, %arg3: memref<1x8xf32, #tpu.memory_space<vmem>>, %arg4: memref<256x8xf32, #tpu.memory_space<vmem>>) attributes {dimension_semantics = [#tpu.dimension_semantics<parallel>], iteration_bounds = array<i64: 2>, scalar_prefetch = 0 : i64, scratch_operands = 0 : i64, tpu.core_type = #tpu.core_type<tc>, window_params = [{transform_indices = @transform_0, window_bounds = array<i64: 256, 36>}, {pipeline_mode = #tpu.pipeline_mode<synchronous>, transform_indices = @transform_1, window_bounds = array<i64: 36, 8>}, {pipeline_mode = #tpu.pipeline_mode<synchronous>, transform_indices = @transform_2, window_bounds = array<i64: 1, 8>}, {transform_indices = @transform_3, window_bounds = array<i64: 256, 8>}]} {
    %c0 = arith.constant 0 : index
    %c0_0 = arith.constant 0 : index
    %0 = vector.load %arg1[%c0, %c0_0] : memref<256x36xbf16, #tpu.memory_space<vmem>>, vector<256x36xbf16>
    %c0_1 = arith.constant 0 : index
    %c0_2 = arith.constant 0 : index
    %1 = vector.load %arg2[%c0_1, %c0_2] : memref<36x8xbf16, #tpu.memory_space<vmem>>, vector<36x8xbf16>
    %cst = arith.constant dense<0.000000e+00> : vector<256x8xf32>
    %2 = tpu.matmul %0, %1, %cst {dimension_numbers = #tpu.dot_dimension_numbers<[1], [0], [0], [1], [0, 0, 1, 1], [], []>} : vector<256x36xbf16>, vector<36x8xbf16>, vector<256x8xf32> -> vector<256x8xf32>
    %c0_3 = arith.constant 0 : index
    %c0_4 = arith.constant 0 : index
    %3 = vector.load %arg3[%c0_3, %c0_4] : memref<1x8xf32, #tpu.memory_space<vmem>>, vector<1x8xf32>
    %4 = vector.broadcast %3 : vector<1x8xf32> to vector<256x8xf32>
    %5 = arith.addf %2, %4 : vector<256x8xf32>
    %cst_5 = arith.constant 0.000000e+00 : f32
    %6 = vector.broadcast %cst_5 : f32 to vector<256x8xf32>
    %7 = arith.maximumf %5, %6 : vector<256x8xf32>
    %c0_6 = arith.constant 0 : index
    %c0_7 = arith.constant 0 : index
    %8 = vector.load %arg4[%c0_6, %c0_7] : memref<256x8xf32, #tpu.memory_space<vmem>>, vector<256x8xf32>
    tpu.vector_store %arg4[%c0_6, %c0_7], %7 {strides = array<i32>} : memref<256x8xf32, #tpu.memory_space<vmem>>, vector<256x8xf32>,
    return
  }
  func.func @transform_0(%arg0: i32) -> (i32, i32) {
    %c0_i32 = arith.constant 0 : i32
    %c0_i32_0 = arith.constant 0 : i32
    return %arg0, %c0_i32 : i32, i32
  }
  func.func @transform_1(%arg0: i32) -> (i32, i32) {
    %c0_i32 = arith.constant 0 : i32
    %c0_i32_0 = arith.constant 0 : i32
    %c0_i32_1 = arith.constant 0 : i32
    return %c0_i32, %c0_i32_0 : i32, i32
  }
  func.func @transform_2(%arg0: i32) -> (i32, i32) {
    %c0_i32 = arith.constant 0 : i32
    %c0_i32_0 = arith.constant 0 : i32
    %c0_i32_1 = arith.constant 0 : i32
    return %c0_i32, %c0_i32_0 : i32, i32
  }
  func.func @transform_3(%arg0: i32) -> (i32, i32) {
    %c0_i32 = arith.constant 0 : i32
    %c0_i32_0 = arith.constant 0 : i32
    return %arg0, %c0_i32 : i32, i32
  }
}

</mosaic_0001>

<llo_original>
// kernel: basic_conv2d.1
$region0: #{basic_conv2d.1}
  #allocation0 [shape = 'u32[]', space=smem, size = 0x4, offset = 0x4, fixed_abs, tag = 'smem constant byte address 0x4 - core index']
  #allocation1 [shape = 'u32[144,128]{1,0:T(1,128)}', space=vmem, size = 0x12000, scoped, tag = 'internal scratch']
  %s0 = inlined_call_operand.vmem [shape: bf16[392,36], index: 0, kind: input, shape index: {}]
  %s1 = inlined_call_operand.vmem [shape: bf16[36,8], index: 1, kind: input, shape index: {}]
  %s2 = inlined_call_operand.vmem [shape: f32[1,8], index: 2, kind: input, shape index: {}]
  %s3 = inlined_call_operand.vmem [shape: f32[392,8], index: 3, kind: output, shape index: {}]
  %s4 = sld [smem:[#allocation0]]
  $region93: #{basic_conv2d.1} parent=0
    _
  %s6 = ssub.s32 1, %s4
  %s7 = scalar_select 0, %s6, %s4
  $region1: #{basic_conv2d.1} parent=0
    #allocation2 [shape = 'u8[262144]{0}', space=vmem, size = 0x40000, scoped, tag = 'output window, operand 0']
    loop: start=0, step=1, limit=4
    $region2: #{basic_conv2d.1} parent=1 // loop_pre_header
      _
    $region3: #{basic_conv2d.1} parent=1 // loop_header
      %s9 = sphi 0, %s13
      %p10 = scmp.ge.s32.totalorder %s9, 4
      %s19 = sphi 0, %s21
      %s22 = sphi 0, %s19
      %s23 = sphi 0, %s22
      %s39 = sphi 0, %s23
      %s43 = sphi 0, %s43
      %s45 = sphi 0, %s43
      %s46 = sphi 0, %s45
      %s60 = sphi 0, %s46
      %s64 = sphi 0, %s64
      %s66 = sphi 0, %s64
      %s67 = sphi 0, %s66
      %s81 = sphi 0, %s67
      %s87 = sphi 0, %s89
      %s90 = sphi 0, %s87
      %s91 = sphi 0, %s90
      %s107 = sphi 0, %s91
    $region4: #{basic_conv2d.1} parent=1 // loop_header_branch
      %12 = sbr.rel (%p10) target = $region8
    $region5: #{basic_conv2d.1} parent=1 // loop_body
      %s14 = ssub.s32 %s9, 1
      %s15 = ssub.s32 %s9, 2
      %s16 = sadd.s32 %s9, 1
      %s17 = ssub.s32 %s9, %s16
      %p18 = scmp.eq.s32.totalorder %s17, 0
      %s20 = sadd.s32 %s19, 1
      %s21 = scalar_select %p18, %s19, %s20
      %p24 = pneg %p18
      %p25 = scmp.eq.s32.totalorder %s9, 1
      %p26 = por %p24, %p25
      %p27 = scmp.ne.s32.totalorder %s19, %s22
      %p28 = scmp.eq.s32.totalorder %s9, 0
      %p29 = por %p27, %p28
      %p30 = scmp.ne.s32.totalorder %s19, %s22
      %p31 = scmp.eq.s32.totalorder %s14, 1
      %p32 = por %p30, %p31
      %p33 = scmp.ne.s32.totalorder %s22, %s23
      %p34 = scmp.eq.s32.totalorder %s14, 0
      %p35 = por %p33, %p34
      %p36 = scmp.ne.s32.totalorder %s22, %s23
      %p37 = scmp.eq.s32.totalorder %s15, 1
      %p38 = por %p36, %p37
      %p40 = scmp.ne.s32.totalorder %s23, %s39
      %p41 = scmp.eq.s32.totalorder %s15, 0
      %p42 = por %p40, %p41
      %s44 = sadd.s32 %s43, 1
      %p47 = scmp.eq.s32.totalorder %s9, 1
      %p48 = scmp.ne.s32.totalorder %s43, %s45
      %p49 = scmp.eq.s32.totalorder %s9, 0
      %p50 = por %p48, %p49
      %p51 = scmp.ne.s32.totalorder %s43, %s45
      %p52 = scmp.eq.s32.totalorder %s14, 1
      %p53 = por %p51, %p52
      %p54 = scmp.ne.s32.totalorder %s45, %s46
      %p55 = scmp.eq.s32.totalorder %s14, 0
      %p56 = por %p54, %p55
      %p57 = scmp.ne.s32.totalorder %s45, %s46
      %p58 = scmp.eq.s32.totalorder %s15, 1
      %p59 = por %p57, %p58
      %p61 = scmp.ne.s32.totalorder %s46, %s60
      %p62 = scmp.eq.s32.totalorder %s15, 0
      %p63 = por %p61, %p62
      %s65 = sadd.s32 %s64, 1
      %p68 = scmp.eq.s32.totalorder %s9, 1
      %p69 = scmp.ne.s32.totalorder %s64, %s66
      %p70 = scmp.eq.s32.totalorder %s9, 0
      %p71 = por %p69, %p70
      %p72 = scmp.ne.s32.totalorder %s64, %s66
      %p73 = scmp.eq.s32.totalorder %s14, 1
      %p74 = por %p72, %p73
      %p75 = scmp.ne.s32.totalorder %s66, %s67
      %p76 = scmp.eq.s32.totalorder %s14, 0
      %p77 = por %p75, %p76
      %p78 = scmp.ne.s32.totalorder %s66, %s67
      %p79 = scmp.eq.s32.totalorder %s15, 1
      %p80 = por %p78, %p79
      %p82 = scmp.ne.s32.totalorder %s67, %s81
      %p83 = scmp.eq.s32.totalorder %s15, 0
      %p84 = por %p82, %p83
      %s85 = ssub.s32 %s9, %s16
      %p86 = scmp.eq.s32.totalorder %s85, 0
      %s88 = sadd.s32 %s87, 1
      %s89 = scalar_select %p86, %s87, %s88
      %p92 = pneg %p86
      %p93 = scmp.eq.s32.totalorder %s9, 1
      %p94 = por %p92, %p93
      %p95 = scmp.ne.s32.totalorder %s87, %s90
      %p96 = scmp.eq.s32.totalorder %s9, 0
      %p97 = por %p95, %p96
      %p98 = scmp.ne.s32.totalorder %s87, %s90
      %p99 = scmp.eq.s32.totalorder %s14, 1
      %p100 = por %p98, %p99
      %p101 = scmp.ne.s32.totalorder %s90, %s91
      %p102 = scmp.eq.s32.totalorder %s14, 0
      %p103 = por %p101, %p102
      %p104 = scmp.ne.s32.totalorder %s90, %s91
      %p105 = scmp.eq.s32.totalorder %s15, 1
      %p106 = por %p104, %p105
      %p108 = scmp.ne.s32.totalorder %s91, %s107
      %p109 = scmp.eq.s32.totalorder %s15, 0
      %p110 = por %p108, %p109
      %p111 = scmp.le.s32.totalorder 1, %s9
      %p112 = scmp.lt.s32.totalorder %s9, 3
      %p113 = pnand %p111, %p112
      %p114 = pneg %p113
      // Predicated region
      $region9: #{basic_conv2d.1} parent=5 // pred_check
        _
      $region10: #{basic_conv2d.1} parent=5 // pred_check_branch
        %116 = sbr.rel (%p113) target = $region12
      $region11: #{basic_conv2d.1} parent=5 // pred_region
        %s117 = ssub.s32 %s9, 1
        // Predicated region
        $region13: #{basic_conv2d.1} parent=11 // pred_check
          %p118 = pneg %p56
        $region14: #{basic_conv2d.1} parent=11 // pred_check_branch
          %120 = sbr.rel (%p118) target = $region16
        $region15: #{basic_conv2d.1} parent=11 // pred_region
          _
        $region16: #{basic_conv2d.1} parent=11 // pred_fallthru
          _
        // Predicated region
        $region17: #{basic_conv2d.1} parent=11 // pred_check
          %p121 = pneg %p77
        $region18: #{basic_conv2d.1} parent=11 // pred_check_branch
          %123 = sbr.rel (%p121) target = $region20
        $region19: #{basic_conv2d.1} parent=11 // pred_region
          _
        $region20: #{basic_conv2d.1} parent=11 // pred_fallthru
          _
      $region12: #{basic_conv2d.1} parent=5 // pred_fallthru
        _
      %p124 = scmp.lt.s32.totalorder %s9, 2
      // Predicated region
      $region21: #{basic_conv2d.1} parent=5 // pred_check
        %p125 = pneg %p124
      $region22: #{basic_conv2d.1} parent=5 // pred_check_branch
        %127 = sbr.rel (%p125) target = $region24
      $region23: #{basic_conv2d.1} parent=5 // pred_region
        // Predicated region
        $region25: #{basic_conv2d.1} parent=23 // pred_check
          %p128 = pneg %p29
        $region26: #{basic_conv2d.1} parent=23 // pred_check_branch
          %130 = sbr.rel (%p128) target = $region28
        $region27: #{basic_conv2d.1} parent=23 // pred_region
          %s131 = smul.u32 32, %s9
          %s132 = ssub.s32 49, %s131
          %p133 = scmp.lt.s32.totalorder %s132, 32
          %s134 = scalar_select %p133, %s132, 32
          %s135 = smul.u32 64, %s134
          %p136 = scmp.lt.s32.totalorder %s131, 48
          %s137 = scalar_select %p136, %s131, 48
          %s138 = smul.addr %s137, 4
          %s139 = scalar_lea.vmem %s0, %s138
          %s140 = smul.u32 32, %s9
          %s141 = ssub.s32 49, %s140
          %p142 = scmp.lt.s32.totalorder %s141, 32
          %s143 = scalar_select %p142, %s141, 32
          %s144 = smul.u32 64, %s143
        $region28: #{basic_conv2d.1} parent=23 // pred_fallthru
          _
      $region24: #{basic_conv2d.1} parent=5 // pred_fallthru
        _
      %p145 = scmp.le.s32.totalorder 1, %s9
      %p146 = scmp.lt.s32.totalorder %s9, 3
      %p147 = pnand %p145, %p146
      %p148 = pneg %p147
      // Predicated region
      $region29: #{basic_conv2d.1} parent=5 // pred_check
        _
      $region30: #{basic_conv2d.1} parent=5 // pred_check_branch
        %150 = sbr.rel (%p147) target = $region32
      $region31: #{basic_conv2d.1} parent=5 // pred_region
        %s151 = ssub.s32 %s9, 1
        %s152 = smul.u32 32, %s14
        %s153 = ssub.s32 49, %s152
        %p154 = scmp.lt.s32.totalorder %s153, 32
        %s155 = scalar_select %p154, %s153, 32
        %s156 = smul.u32 64, %s155
        %p157 = scmp.lt.s32.totalorder %s152, 48
        %s158 = scalar_select %p157, %s152, 48
        %s159 = smul.addr %s158, 4
        %s160 = scalar_lea.vmem %s0, %s159
        %p161 = pneg %p35
        %p162 = pneg %p32
        %p163 = pneg %p56
        %p164 = pneg %p53
        %p165 = pneg %p77
        %p166 = pneg %p74
        %p167 = pneg %p103
        %p168 = pneg %p100
        %s169 = sand.u32 %s90, 1
        %s170 = sand.u32 %s90, 1
        %s171 = smul.addr %s170, 256
        %s172 = scalar_lea.vmem [#allocation2], %s171
        %s173 = smul.u32 32, %s14
        %s174 = ssub.s32 49, %s173
        %p175 = scmp.lt.s32.totalorder %s174, 32
        %s176 = scalar_select %p175, %s174, 32
        %s177 = smul.u32 64, %s176
        %p178 = scmp.lt.s32.totalorder %s173, 48
        %s179 = scalar_select %p178, %s173, 48
        %s180 = smul.addr %s179, 4
        %s181 = scalar_lea.vmem %s0, %s180
        %s182 = smul.u32 32, %s14
        %s183 = ssub.s32 49, %s182
        %p184 = scmp.lt.s32.totalorder %s183, 32
        %s185 = scalar_select %p184, %s183, 32
        %s186 = smul.u32 64, %s185
        %s187 = smul.u32 32, %s14
        %s188 = ssub.s32 49, %s187
        %p189 = scmp.lt.s32.totalorder %s188, 32
        %s190 = scalar_select %p189, %s188, 32
        %s191 = smul.u32 128, %s190
        %v193 = vld [vmem:[%s181] sm:$0xf]
        %v194 = vld [vmem:[%s181 + $0x4] sm:$0xf]
        %v195 = vld [vmem:[%s181 + $0x8] sm:$0xf]
        %v196 = vld [vmem:[%s181 + $0xc] sm:$0xf]
        %v197 = vld [vmem:[%s181 + $0x10] sm:$0xf]
        %v198 = vld [vmem:[%s181 + $0x14] sm:$0xf]
        %v199 = vld [vmem:[%s181 + $0x18] sm:$0xf]
        %v200 = vld [vmem:[%s181 + $0x1c] sm:$0xf]
        %v201 = vld [vmem:[%s181 + $0x20] sm:$0xf]
        %v202 = vld [vmem:[%s181 + $0x24] sm:$0xf]
        %v203 = vld [vmem:[%s181 + $0x28] sm:$0xf]
        %v204 = vld [vmem:[%s181 + $0x2c] sm:$0xf]
        %v205 = vld [vmem:[%s181 + $0x30] sm:$0xf]
        %v206 = vld [vmem:[%s181 + $0x34] sm:$0xf]
        %v207 = vld [vmem:[%s181 + $0x38] sm:$0xf]
        %v208 = vld [vmem:[%s181 + $0x3c] sm:$0xf]
        %v209 = vld [vmem:[%s181 + $0x40] sm:$0xf]
        %v210 = vld [vmem:[%s181 + $0x44] sm:$0xf]
        %v211 = vld [vmem:[%s181 + $0x48] sm:$0xf]
        %v212 = vld [vmem:[%s181 + $0x4c] sm:$0xf]
        %v213 = vld [vmem:[%s181 + $0x50] sm:$0xf]
        %v214 = vld [vmem:[%s181 + $0x54] sm:$0xf]
        %v215 = vld [vmem:[%s181 + $0x58] sm:$0xf]
        %v216 = vld [vmem:[%s181 + $0x5c] sm:$0xf]
        %v217 = vld [vmem:[%s181 + $0x60] sm:$0xf]
        %v218 = vld [vmem:[%s181 + $0x64] sm:$0xf]
        %v219 = vld [vmem:[%s181 + $0x68] sm:$0xf]
        %v220 = vld [vmem:[%s181 + $0x6c] sm:$0xf]
        %v221 = vld [vmem:[%s181 + $0x70] sm:$0xf]
        %v222 = vld [vmem:[%s181 + $0x74] sm:$0xf]
        %v223 = vld [vmem:[%s181 + $0x78] sm:$0xf]
        %v224 = vld [vmem:[%s181 + $0x7c] sm:$0xf]
        %v225 = vld [vmem:[%s1] sm:$0xf]
        %v226 = vld [vmem:[%s1 + $0x4] sm:$0xf]
        %v227 = vld [vmem:[%s1 + $0x8] sm:$0xf]
        %v228 = vld [vmem:[%s1 + $0xc] sm:$0xf]
        %v229 = vld [vmem:[%s1 + $0x10] sm:$0x3]
        %v230 = vld [vmem:[%s2] sm:$0x1]
        %v232 = vlaneseq
        %v233 = vshrl.u32 %v232, 7
        %v234 = vsub.s32 0, %v233
        %v235 = vrot.slane %v230, %v234
        %v269 = vunpack.c.l.b16 %v193
        %v270 = vunpack.c.l.b16 %v194
        %v271 = vunpack.c.l.b16 %v195
        %v272 = vunpack.c.l.b16 %v196
        %v273 = vunpack.c.l.b16 %v197
        %v274 = vunpack.c.l.b16 %v198
        %v275 = vunpack.c.l.b16 %v199
        %v276 = vunpack.c.l.b16 %v200
        %v277 = vunpack.c.l.b16 %v201
        %v278 = vunpack.c.l.b16 %v202
        %v279 = vunpack.c.l.b16 %v203
        %v280 = vunpack.c.l.b16 %v204
        %v281 = vunpack.c.l.b16 %v205
        %v282 = vunpack.c.l.b16 %v206
        %v283 = vunpack.c.l.b16 %v207
        %v284 = vunpack.c.l.b16 %v208
        %v285 = vunpack.c.l.b16 %v209
        %v286 = vunpack.c.l.b16 %v210
        %v287 = vunpack.c.l.b16 %v211
        %v288 = vunpack.c.l.b16 %v212
        %v289 = vunpack.c.l.b16 %v213
        %v290 = vunpack.c.l.b16 %v214
        %v291 = vunpack.c.l.b16 %v215
        %v292 = vunpack.c.l.b16 %v216
        %v293 = vunpack.c.l.b16 %v217
        %v294 = vunpack.c.l.b16 %v218
        %v295 = vunpack.c.l.b16 %v219
        %v296 = vunpack.c.l.b16 %v220
        %v297 = vunpack.c.l.b16 %v221
        %v298 = vunpack.c.l.b16 %v222
        %v299 = vunpack.c.l.b16 %v223
        %v300 = vunpack.c.l.b16 %v224
        %v301 = vpack.c.b16 %v270, %v269
        %v302 = vpack.c.b16 %v272, %v271
        %v303 = vpack.c.b16 %v274, %v273
        %v304 = vpack.c.b16 %v276, %v275
        %v305 = vpack.c.b16 %v278, %v277
        %v306 = vpack.c.b16 %v280, %v279
        %v307 = vpack.c.b16 %v282, %v281
        %v308 = vpack.c.b16 %v284, %v283
        %v309 = vpack.c.b16 %v286, %v285
        %v310 = vpack.c.b16 %v288, %v287
        %v311 = vpack.c.b16 %v290, %v289
        %v312 = vpack.c.b16 %v292, %v291
        %v313 = vpack.c.b16 %v294, %v293
        %v314 = vpack.c.b16 %v296, %v295
        %v315 = vpack.c.b16 %v298, %v297
        %v316 = vpack.c.b16 %v300, %v299
        %v322 = vunpack.c.l.b16 %v225
        %v323 = vunpack.c.l.b16 %v226
        %v324 = vunpack.c.l.b16 %v227
        %v325 = vunpack.c.l.b16 %v228
        %v326 = vunpack.c.l.b16 %v229
        %v327 = vpack.c.b16 %v323, %v322
        %v328 = vpack.c.b16 %v325, %v324
        %v329 = vpack.c.b16 %v326, %v326
        %vm332 = vcmask 293888
        %v334 = vsel %vm332, %v301, 0
        %v337 = vsel %vm332, %v302, 0
        %v340 = vsel %vm332, %v303, 0
        %v343 = vsel %vm332, %v304, 0
        %v346 = vsel %vm332, %v305, 0
        %v349 = vsel %vm332, %v306, 0
        %v352 = vsel %vm332, %v307, 0
        %v355 = vsel %vm332, %v308, 0
        %v358 = vsel %vm332, %v309, 0
        %v361 = vsel %vm332, %v310, 0
        %v364 = vsel %vm332, %v311, 0
        %v367 = vsel %vm332, %v312, 0
        %v370 = vsel %vm332, %v313, 0
        %v373 = vsel %vm332, %v314, 0
        %v376 = vsel %vm332, %v315, 0
        %v379 = vsel %vm332, %v316, 0
        %vm381 = vcmask 1041408
        %v383 = vsel %vm381, %v329, 0
        %385 = vmatprep.subr.bf16.mxu0 0
        %386 = vmatpush1.bf16.msra.mxu0 %v327
        %387 = vmatprep.subr.bf16.mxu0 0
        %388 = vmatpush1.bf16.msra.mxu0 %v328
        %389 = vmatprep.subr.bf16.mxu0 0
        %390 = vmatpush1.bf16.msra.mxu0 %v383
        %391 = vmatprep.subr.bf16.mxu0 0
        %392 = vmatpush1.bf16.msra.mxu0 0
        %393 = vmatprep.subr.bf16.mxu0 0
        %394 = vmatpush1.bf16.msra.mxu0 0
        %395 = vmatprep.subr.bf16.mxu0 0
        %396 = vmatpush1.bf16.msra.mxu0 0
        %397 = vmatprep.subr.bf16.mxu0 0
        %398 = vmatpush1.bf16.msra.mxu0 0
        %399 = vmatprep.subr.bf16.mxu0 0
        %400 = vmatpush1.bf16.msra.mxu0 0
        %401 = vmatprep.subr.bf16.mxu0 0
        %402 = vmatpush1.bf16.msra.mxu0 0
        %403 = vmatprep.subr.bf16.mxu0 0
        %404 = vmatpush1.bf16.msra.mxu0 0
        %405 = vmatprep.subr.bf16.mxu0 0
        %406 = vmatpush1.bf16.msra.mxu0 0
        %407 = vmatprep.subr.bf16.mxu0 0
        %408 = vmatpush1.bf16.msra.mxu0 0
        %409 = vmatprep.subr.bf16.mxu0 0
        %410 = vmatpush1.bf16.msra.mxu0 0
        %411 = vmatprep.subr.bf16.mxu0 0
        %412 = vmatpush1.bf16.msra.mxu0 0
        %413 = vmatprep.subr.bf16.mxu0 0
        %414 = vmatpush1.bf16.msra.mxu0 0
        %415 = vmatprep.subr.bf16.mxu0 0
        %416 = vmatpush1.bf16.msra.mxu0 0
        %417 = vmatprep.mubr.bf16.mxu0 0
        %418 = vmatmul.mubr.bf16.gmra.mrb[0].mxu0 %v334
        %v419 = vpop.f32.mrb[0].mxu0
        %v420 = vadd.f32 %v235, %v419
        %v421 = vpop.f32.mrb[0].mxu0
        %v422 = vpop.f32.mrb[0].mxu0
        %v423 = vadd.f32 %v235, %v422
        %v424 = vpop.f32.mrb[0].mxu0
        %425 = vmatprep.mubr.bf16.mxu0 0
        %426 = vmatmul.mubr.bf16.gmra.mrb[0].mxu0 %v337
        %v427 = vpop.f32.mrb[0].mxu0
        %v428 = vadd.f32 %v235, %v427
        %v429 = vpop.f32.mrb[0].mxu0
        %v430 = vpop.f32.mrb[0].mxu0
        %v431 = vadd.f32 %v235, %v430
        %v432 = vpop.f32.mrb[0].mxu0
        %433 = vmatprep.mubr.bf16.mxu0 0
        %434 = vmatmul.mubr.bf16.gmra.mrb[0].mxu0 %v340
        %v435 = vpop.f32.mrb[0].mxu0
        %v436 = vadd.f32 %v235, %v435
        %v437 = vpop.f32.mrb[0].mxu0
        %v438 = vpop.f32.mrb[0].mxu0
        %v439 = vadd.f32 %v235, %v438
        %v440 = vpop.f32.mrb[0].mxu0
        %441 = vmatprep.mubr.bf16.mxu0 0
        %442 = vmatmul.mubr.bf16.gmra.mrb[0].mxu0 %v343
        %v443 = vpop.f32.mrb[0].mxu0
        %v444 = vadd.f32 %v235, %v443
        %v445 = vpop.f32.mrb[0].mxu0
        %v446 = vpop.f32.mrb[0].mxu0
        %v447 = vadd.f32 %v235, %v446
        %v448 = vpop.f32.mrb[0].mxu0
        %449 = vmatprep.mubr.bf16.mxu0 0
        %450 = vmatmul.mubr.bf16.gmra.mrb[0].mxu0 %v346
        %v451 = vpop.f32.mrb[0].mxu0
        %v452 = vadd.f32 %v235, %v451
        %v453 = vpop.f32.mrb[0].mxu0
        %v454 = vpop.f32.mrb[0].mxu0
        %v455 = vadd.f32 %v235, %v454
        %v456 = vpop.f32.mrb[0].mxu0
        %457 = vmatprep.mubr.bf16.mxu0 0
        %458 = vmatmul.mubr.bf16.gmra.mrb[0].mxu0 %v349
        %v459 = vpop.f32.mrb[0].mxu0
        %v460 = vadd.f32 %v235, %v459
        %v461 = vpop.f32.mrb[0].mxu0
        %v462 = vpop.f32.mrb[0].mxu0
        %v463 = vadd.f32 %v235, %v462
        %v464 = vpop.f32.mrb[0].mxu0
        %465 = vmatprep.mubr.bf16.mxu0 0
        %466 = vmatmul.mubr.bf16.gmra.mrb[0].mxu0 %v352
        %v467 = vpop.f32.mrb[0].mxu0
        %v468 = vadd.f32 %v235, %v467
        %v469 = vpop.f32.mrb[0].mxu0
        %v470 = vpop.f32.mrb[0].mxu0
        %v471 = vadd.f32 %v235, %v470
        %v472 = vpop.f32.mrb[0].mxu0
        %473 = vmatprep.mubr.bf16.mxu0 0
        %474 = vmatmul.mubr.bf16.gmra.mrb[0].mxu0 %v355
        %v475 = vpop.f32.mrb[0].mxu0
        %v476 = vadd.f32 %v235, %v475
        %v477 = vpop.f32.mrb[0].mxu0
        %v478 = vpop.f32.mrb[0].mxu0
        %v479 = vadd.f32 %v235, %v478
        %v480 = vpop.f32.mrb[0].mxu0
        %481 = vmatprep.mubr.bf16.mxu0 0
        %482 = vmatmul.mubr.bf16.gmra.mrb[0].mxu0 %v358
        %v483 = vpop.f32.mrb[0].mxu0
        %v484 = vadd.f32 %v235, %v483
        %v485 = vpop.f32.mrb[0].mxu0
        %v486 = vpop.f32.mrb[0].mxu0
        %v487 = vadd.f32 %v235, %v486
        %v488 = vpop.f32.mrb[0].mxu0
        %489 = vmatprep.mubr.bf16.mxu0 0
        %490 = vmatmul.mubr.bf16.gmra.mrb[0].mxu0 %v361
        %v491 = vpop.f32.mrb[0].mxu0
        %v492 = vadd.f32 %v235, %v491
        %v493 = vpop.f32.mrb[0].mxu0
        %v494 = vpop.f32.mrb[0].mxu0
        %v495 = vadd.f32 %v235, %v494
        %v496 = vpop.f32.mrb[0].mxu0
        %497 = vmatprep.mubr.bf16.mxu0 0
        %498 = vmatmul.mubr.bf16.gmra.mrb[0].mxu0 %v364
        %v499 = vpop.f32.mrb[0].mxu0
        %v500 = vadd.f32 %v235, %v499
        %v501 = vpop.f32.mrb[0].mxu0
        %v502 = vpop.f32.mrb[0].mxu0
        %v503 = vadd.f32 %v235, %v502
        %v504 = vpop.f32.mrb[0].mxu0
        %505 = vmatprep.mubr.bf16.mxu0 0
        %506 = vmatmul.mubr.bf16.gmra.mrb[0].mxu0 %v367
        %v507 = vpop.f32.mrb[0].mxu0
        %v508 = vadd.f32 %v235, %v507
        %v509 = vpop.f32.mrb[0].mxu0
        %v510 = vpop.f32.mrb[0].mxu0
        %v511 = vadd.f32 %v235, %v510
        %v512 = vpop.f32.mrb[0].mxu0
        %513 = vmatprep.mubr.bf16.mxu0 0
        %514 = vmatmul.mubr.bf16.gmra.mrb[0].mxu0 %v370
        %v515 = vpop.f32.mrb[0].mxu0
        %v516 = vadd.f32 %v235, %v515
        %v517 = vpop.f32.mrb[0].mxu0
        %v518 = vpop.f32.mrb[0].mxu0
        %v519 = vadd.f32 %v235, %v518
        %v520 = vpop.f32.mrb[0].mxu0
        %521 = vmatprep.mubr.bf16.mxu0 0
        %522 = vmatmul.mubr.bf16.gmra.mrb[0].mxu0 %v373
        %v523 = vpop.f32.mrb[0].mxu0
        %v524 = vadd.f32 %v235, %v523
        %v525 = vpop.f32.mrb[0].mxu0
        %v526 = vpop.f32.mrb[0].mxu0
        %v527 = vadd.f32 %v235, %v526
        %v528 = vpop.f32.mrb[0].mxu0
        %529 = vmatprep.mubr.bf16.mxu0 0
        %530 = vmatmul.mubr.bf16.gmra.mrb[0].mxu0 %v376
        %v531 = vpop.f32.mrb[0].mxu0
        %v532 = vadd.f32 %v235, %v531
        %v533 = vpop.f32.mrb[0].mxu0
        %v534 = vpop.f32.mrb[0].mxu0
        %v535 = vadd.f32 %v235, %v534
        %v536 = vpop.f32.mrb[0].mxu0
        %537 = vmatprep.mubr.bf16.mxu0 0
        %538 = vmatmul.mubr.bf16.gmra.mrb[0].mxu0 %v379
        %v539 = vpop.f32.mrb[0].mxu0
        %v540 = vadd.f32 %v235, %v539
        %v541 = vpop.f32.mrb[0].mxu0
        %v542 = vpop.f32.mrb[0].mxu0
        %v543 = vadd.f32 %v235, %v542
        %v544 = vpop.f32.mrb[0].mxu0
        %545 = vdwg.mxu0
        %v546 = vmax.f32 %v420, 0.0
        %v547 = vmax.f32 %v423, 0.0
        %v548 = vmax.f32 %v428, 0.0
        %v549 = vmax.f32 %v431, 0.0
        %v550 = vmax.f32 %v436, 0.0
        %v551 = vmax.f32 %v439, 0.0
        %v552 = vmax.f32 %v444, 0.0
        %v553 = vmax.f32 %v447, 0.0
        %v554 = vmax.f32 %v452, 0.0
        %v555 = vmax.f32 %v455, 0.0
        %v556 = vmax.f32 %v460, 0.0
        %v557 = vmax.f32 %v463, 0.0
        %v558 = vmax.f32 %v468, 0.0
        %v559 = vmax.f32 %v471, 0.0
        %v560 = vmax.f32 %v476, 0.0
        %v561 = vmax.f32 %v479, 0.0
        %v562 = vmax.f32 %v484, 0.0
        %v563 = vmax.f32 %v487, 0.0
        %v564 = vmax.f32 %v492, 0.0
        %v565 = vmax.f32 %v495, 0.0
        %v566 = vmax.f32 %v500, 0.0
        %v567 = vmax.f32 %v503, 0.0
        %v568 = vmax.f32 %v508, 0.0
        %v569 = vmax.f32 %v511, 0.0
        %v570 = vmax.f32 %v516, 0.0
        %v571 = vmax.f32 %v519, 0.0
        %v572 = vmax.f32 %v524, 0.0
        %v573 = vmax.f32 %v527, 0.0
        %v574 = vmax.f32 %v532, 0.0
        %v575 = vmax.f32 %v535, 0.0
        %v576 = vmax.f32 %v540, 0.0
        %v577 = vmax.f32 %v543, 0.0
        %vm578 = vcmask 64512
        %579 = vst.msk [vmem:[%s172] sm:$0xff] %vm578, %v546
        %580 = vst.msk [vmem:[%s172 + $0x8] sm:$0xff] %vm578, %v547
        %581 = vst.msk [vmem:[%s172 + $0x10] sm:$0xff] %vm578, %v548
        %582 = vst.msk [vmem:[%s172 + $0x18] sm:$0xff] %vm578, %v549
        %583 = vst.msk [vmem:[%s172 + $0x20] sm:$0xff] %vm578, %v550
        %584 = vst.msk [vmem:[%s172 + $0x28] sm:$0xff] %vm578, %v551
        %585 = vst.msk [vmem:[%s172 + $0x30] sm:$0xff] %vm578, %v552
        %586 = vst.msk [vmem:[%s172 + $0x38] sm:$0xff] %vm578, %v553
        %587 = vst.msk [vmem:[%s172 + $0x40] sm:$0xff] %vm578, %v554
        %588 = vst.msk [vmem:[%s172 + $0x48] sm:$0xff] %vm578, %v555
        %589 = vst.msk [vmem:[%s172 + $0x50] sm:$0xff] %vm578, %v556
        %590 = vst.msk [vmem:[%s172 + $0x58] sm:$0xff] %vm578, %v557
        %591 = vst.msk [vmem:[%s172 + $0x60] sm:$0xff] %vm578, %v558
        %592 = vst.msk [vmem:[%s172 + $0x68] sm:$0xff] %vm578, %v559
        %593 = vst.msk [vmem:[%s172 + $0x70] sm:$0xff] %vm578, %v560
        %594 = vst.msk [vmem:[%s172 + $0x78] sm:$0xff] %vm578, %v561
        %595 = vst.msk [vmem:[%s172 + $0x80] sm:$0xff] %vm578, %v562
        %596 = vst.msk [vmem:[%s172 + $0x88] sm:$0xff] %vm578, %v563
        %597 = vst.msk [vmem:[%s172 + $0x90] sm:$0xff] %vm578, %v564
        %598 = vst.msk [vmem:[%s172 + $0x98] sm:$0xff] %vm578, %v565
        %599 = vst.msk [vmem:[%s172 + $0xa0] sm:$0xff] %vm578, %v566
        %600 = vst.msk [vmem:[%s172 + $0xa8] sm:$0xff] %vm578, %v567
        %601 = vst.msk [vmem:[%s172 + $0xb0] sm:$0xff] %vm578, %v568
        %602 = vst.msk [vmem:[%s172 + $0xb8] sm:$0xff] %vm578, %v569
        %603 = vst.msk [vmem:[%s172 + $0xc0] sm:$0xff] %vm578, %v570
        %604 = vst.msk [vmem:[%s172 + $0xc8] sm:$0xff] %vm578, %v571
        %605 = vst.msk [vmem:[%s172 + $0xd0] sm:$0xff] %vm578, %v572
        %606 = vst.msk [vmem:[%s172 + $0xd8] sm:$0xff] %vm578, %v573
        %607 = vst.msk [vmem:[%s172 + $0xe0] sm:$0xff] %vm578, %v574
        %608 = vst.msk [vmem:[%s172 + $0xe8] sm:$0xff] %vm578, %v575
        %609 = vst.msk [vmem:[%s172 + $0xf0] sm:$0xff] %vm578, %v576
        %610 = vst.msk [vmem:[%s172 + $0xf8] sm:$0xff] %vm578, %v577
        %s611 = sand.u32 %s90, 1
        %s612 = sand.u32 %s90, 1
        %s613 = smul.addr %s612, 256
        %s614 = scalar_lea.vmem [#allocation2], %s613
        // Predicated region
        $region33: #{basic_conv2d.1} parent=31 // pred_check
          %p615 = pneg %p100
        $region34: #{basic_conv2d.1} parent=31 // pred_check_branch
          %617 = sbr.rel (%p615) target = $region36
        $region35: #{basic_conv2d.1} parent=31 // pred_region
          %s618 = smul.u32 32, %s14
          %s619 = ssub.s32 49, %s618
          %p620 = scmp.lt.s32.totalorder %s619, 32
          %s621 = scalar_select %p620, %s619, 32
          %s622 = smul.u32 128, %s621
          %p623 = scmp.ne.s32.totalorder 0, %s622
          %s624 = smul.addr %s618, 8
          %s625 = scalar_lea.vmem %s3, %s624
          // Predicated region
          $region37: #{basic_conv2d.1} parent=35 // pred_check
            %p626 = pneg %p623
          $region38: #{basic_conv2d.1} parent=35 // pred_check_branch
            %628 = sbr.rel (%p626) target = $region40
          $region39: #{basic_conv2d.1} parent=35 // pred_region
            // Predicated region
            $region41: #{basic_conv2d.1} parent=39 // pred_check
              _
            $region42: #{basic_conv2d.1} parent=39 // pred_check_branch
              %630 = sbr.rel (0) target = $region44
            $region43: #{basic_conv2d.1} parent=39 // pred_region
              // Predicated region
              $region63: #{basic_conv2d.1} parent=43 // pred_check
                _
              $region64: #{basic_conv2d.1} parent=43 // pred_check_branch
                %741 = sbr.rel (0) target = $region66
              $region65: #{basic_conv2d.1} parent=43 // pred_region
                %s742 = sshrl.u32 %s621, 5
                // While loop
                $region67: #{basic_conv2d.1} parent=65 // loop_pre_header
                  _
                $region68: #{basic_conv2d.1} parent=65 // loop_header
                  %s744 = sphi 0, %s746
                  %p745 = scmp.ge.s32.totalorder %s744, %s742
                  %s749 = sphi 0, %s818
                  %s750 = sphi %s614, %s821
                  %s751 = sphi %s625, %s822
                $region69: #{basic_conv2d.1} parent=65 // loop_header_branch
                  %748 = sbr.rel (%p745) target = $region73
                $region70: #{basic_conv2d.1} parent=65 // loop_body
                  %v752 = vld [vmem:[%s750] sm:$0xff]
                  %753 = vst [vmem:[%s751] sm:$0xff] %v752
                  %v754 = vld [vmem:[%s750 + $0x8] sm:$0xff]
                  %755 = vst [vmem:[%s751 + $0x8] sm:$0xff] %v754
                  %v756 = vld [vmem:[%s750 + $0x10] sm:$0xff]
                  %757 = vst [vmem:[%s751 + $0x10] sm:$0xff] %v756
                  %v758 = vld [vmem:[%s750 + $0x18] sm:$0xff]
                  %759 = vst [vmem:[%s751 + $0x18] sm:$0xff] %v758
                  %v760 = vld [vmem:[%s750 + $0x20] sm:$0xff]
                  %761 = vst [vmem:[%s751 + $0x20] sm:$0xff] %v760
                  %v762 = vld [vmem:[%s750 + $0x28] sm:$0xff]
                  %763 = vst [vmem:[%s751 + $0x28] sm:$0xff] %v762
                  %v764 = vld [vmem:[%s750 + $0x30] sm:$0xff]
                  %765 = vst [vmem:[%s751 + $0x30] sm:$0xff] %v764
                  %v766 = vld [vmem:[%s750 + $0x38] sm:$0xff]
                  %767 = vst [vmem:[%s751 + $0x38] sm:$0xff] %v766
                  %v768 = vld [vmem:[%s750 + $0x40] sm:$0xff]
                  %769 = vst [vmem:[%s751 + $0x40] sm:$0xff] %v768
                  %v770 = vld [vmem:[%s750 + $0x48] sm:$0xff]
                  %771 = vst [vmem:[%s751 + $0x48] sm:$0xff] %v770
                  %v772 = vld [vmem:[%s750 + $0x50] sm:$0xff]
                  %773 = vst [vmem:[%s751 + $0x50] sm:$0xff] %v772
                  %v774 = vld [vmem:[%s750 + $0x58] sm:$0xff]
                  %775 = vst [vmem:[%s751 + $0x58] sm:$0xff] %v774
                  %v776 = vld [vmem:[%s750 + $0x60] sm:$0xff]
                  %777 = vst [vmem:[%s751 + $0x60] sm:$0xff] %v776
                  %v778 = vld [vmem:[%s750 + $0x68] sm:$0xff]
                  %779 = vst [vmem:[%s751 + $0x68] sm:$0xff] %v778
                  %v780 = vld [vmem:[%s750 + $0x70] sm:$0xff]
                  %781 = vst [vmem:[%s751 + $0x70] sm:$0xff] %v780
                  %v782 = vld [vmem:[%s750 + $0x78] sm:$0xff]
                  %783 = vst [vmem:[%s751 + $0x78] sm:$0xff] %v782
                  %v784 = vld [vmem:[%s750 + $0x80] sm:$0xff]
                  %785 = vst [vmem:[%s751 + $0x80] sm:$0xff] %v784
                  %v786 = vld [vmem:[%s750 + $0x88] sm:$0xff]
                  %787 = vst [vmem:[%s751 + $0x88] sm:$0xff] %v786
                  %v788 = vld [vmem:[%s750 + $0x90] sm:$0xff]
                  %789 = vst [vmem:[%s751 + $0x90] sm:$0xff] %v788
                  %v790 = vld [vmem:[%s750 + $0x98] sm:$0xff]
                  %791 = vst [vmem:[%s751 + $0x98] sm:$0xff] %v790
                  %v792 = vld [vmem:[%s750 + $0xa0] sm:$0xff]
                  %793 = vst [vmem:[%s751 + $0xa0] sm:$0xff] %v792
                  %v794 = vld [vmem:[%s750 + $0xa8] sm:$0xff]
                  %795 = vst [vmem:[%s751 + $0xa8] sm:$0xff] %v794
                  %v796 = vld [vmem:[%s750 + $0xb0] sm:$0xff]
                  %797 = vst [vmem:[%s751 + $0xb0] sm:$0xff] %v796
                  %v798 = vld [vmem:[%s750 + $0xb8] sm:$0xff]
                  %799 = vst [vmem:[%s751 + $0xb8] sm:$0xff] %v798
                  %v800 = vld [vmem:[%s750 + $0xc0] sm:$0xff]
                  %801 = vst [vmem:[%s751 + $0xc0] sm:$0xff] %v800
                  %v802 = vld [vmem:[%s750 + $0xc8] sm:$0xff]
                  %803 = vst [vmem:[%s751 + $0xc8] sm:$0xff] %v802
                  %v804 = vld [vmem:[%s750 + $0xd0] sm:$0xff]
                  %805 = vst [vmem:[%s751 + $0xd0] sm:$0xff] %v804
                  %v806 = vld [vmem:[%s750 + $0xd8] sm:$0xff]
                  %807 = vst [vmem:[%s751 + $0xd8] sm:$0xff] %v806
                  %v808 = vld [vmem:[%s750 + $0xe0] sm:$0xff]
                  %809 = vst [vmem:[%s751 + $0xe0] sm:$0xff] %v808
                  %v810 = vld [vmem:[%s750 + $0xe8] sm:$0xff]
                  %811 = vst [vmem:[%s751 + $0xe8] sm:$0xff] %v810
                  %v812 = vld [vmem:[%s750 + $0xf0] sm:$0xff]
                  %813 = vst [vmem:[%s751 + $0xf0] sm:$0xff] %v812
                  %v814 = vld [vmem:[%s750 + $0xf8] sm:$0xff]
                  %815 = vst [vmem:[%s751 + $0xf8] sm:$0xff] %v814
                  %s816 = sadd.s32 1, %s749
                  %p817 = scmp.ge.s32.totalorder %s816, %s742
                  %s818 = scalar_select %p817, 0, %s816
                  %s819 = smul.u32 %s818, 256
                  %s820 = smul.u32 %s818, 256
                  %s821 = scalar_lea.vmem %s614, %s819 [#allocation2]
                  %s822 = scalar_lea.vmem %s625, %s820
                $region71: #{basic_conv2d.1} parent=65 // loop_footer
                  %s746 = sadd.s32 %s744, 1
                $region72: #{basic_conv2d.1} parent=65 // loop_footer_branch
                  %743 = sbr.rel target = $region68
                $region73: #{basic_conv2d.1} parent=65 // loop_exit
                  _
                %s823 = sshrl.u32 %s621, 5
                %s824 = sand.u32 %s621, 31
                %s825 = smul.u32 %s823, 32
                %s826 = smul.u32 8, %s825
                %s827 = scalar_lea.vmem %s614, %s826 [#allocation2]
                %s828 = smul.u32 8, %s825
                %s829 = scalar_lea.vmem %s625, %s828
                // While loop
                $region74: #{basic_conv2d.1} parent=65 // loop_pre_header
                  _
                $region75: #{basic_conv2d.1} parent=65 // loop_header
                  %s831 = sphi 0, %s833
                  %p832 = scmp.ge.s32.totalorder %s831, %s824
                  %s836 = sphi 0, %s843
                  %s837 = sphi %s827, %s846
                  %s838 = sphi %s829, %s847
                $region76: #{basic_conv2d.1} parent=65 // loop_header_branch
                  %835 = sbr.rel (%p832) target = $region80
                $region77: #{basic_conv2d.1} parent=65 // loop_body
                  %v839 = vld [vmem:[%s837] sm:$0xff]
                  %840 = vst [vmem:[%s838] sm:$0xff] %v839
                  %s841 = sadd.s32 1, %s836
                  %p842 = scmp.ge.s32.totalorder %s841, %s824
                  %s843 = scalar_select %p842, 0, %s841
                  %s844 = smul.u32 %s843, 8
                  %s845 = smul.u32 %s843, 8
                  %s846 = scalar_lea.vmem %s827, %s844 [#allocation2]
                  %s847 = scalar_lea.vmem %s829, %s845
                $region78: #{basic_conv2d.1} parent=65 // loop_footer
                  %s833 = sadd.s32 %s831, 1
                $region79: #{basic_conv2d.1} parent=65 // loop_footer_branch
                  %830 = sbr.rel target = $region75
                $region80: #{basic_conv2d.1} parent=65 // loop_exit
                  _
              $region66: #{basic_conv2d.1} parent=43 // pred_fallthru
                _
              // Predicated region
              $region81: #{basic_conv2d.1} parent=43 // pred_check
                _
              $region82: #{basic_conv2d.1} parent=43 // pred_check_branch
                %849 = sbr.rel target = $region84
              $region83: #{basic_conv2d.1} parent=43 // pred_region
                _
              $region84: #{basic_conv2d.1} parent=43 // pred_fallthru
                _
            $region44: #{basic_conv2d.1} parent=39 // pred_fallthru
              _
            // Predicated region
            $region45: #{basic_conv2d.1} parent=39 // pred_check
              _
            $region46: #{basic_conv2d.1} parent=39 // pred_check_branch
              %632 = sbr.rel target = $region48
            $region47: #{basic_conv2d.1} parent=39 // pred_region
              %s634 = sshrl.u32 %s621, 5
              // While loop
              $region49: #{basic_conv2d.1} parent=47 // loop_pre_header
                _
              $region50: #{basic_conv2d.1} parent=47 // loop_header
                %s636 = sphi 0, %s638
                %p637 = scmp.ge.s32.totalorder %s636, %s634
                %s641 = sphi 0, %s710
                %s642 = sphi %s614, %s713
                %s643 = sphi %s625, %s714
              $region51: #{basic_conv2d.1} parent=47 // loop_header_branch
                %640 = sbr.rel (%p637) target = $region55
              $region52: #{basic_conv2d.1} parent=47 // loop_body
                %v644 = vld [vmem:[%s642] sm:$0xff]
                %645 = vst [vmem:[%s643] sm:$0xff] %v644
                %v646 = vld [vmem:[%s642 + $0x8] sm:$0xff]
                %647 = vst [vmem:[%s643 + $0x8] sm:$0xff] %v646
                %v648 = vld [vmem:[%s642 + $0x10] sm:$0xff]
                %649 = vst [vmem:[%s643 + $0x10] sm:$0xff] %v648
                %v650 = vld [vmem:[%s642 + $0x18] sm:$0xff]
                %651 = vst [vmem:[%s643 + $0x18] sm:$0xff] %v650
                %v652 = vld [vmem:[%s642 + $0x20] sm:$0xff]
                %653 = vst [vmem:[%s643 + $0x20] sm:$0xff] %v652
                %v654 = vld [vmem:[%s642 + $0x28] sm:$0xff]
                %655 = vst [vmem:[%s643 + $0x28] sm:$0xff] %v654
                %v656 = vld [vmem:[%s642 + $0x30] sm:$0xff]
                %657 = vst [vmem:[%s643 + $0x30] sm:$0xff] %v656
                %v658 = vld [vmem:[%s642 + $0x38] sm:$0xff]
                %659 = vst [vmem:[%s643 + $0x38] sm:$0xff] %v658
                %v660 = vld [vmem:[%s642 + $0x40] sm:$0xff]
                %661 = vst [vmem:[%s643 + $0x40] sm:$0xff] %v660
                %v662 = vld [vmem:[%s642 + $0x48] sm:$0xff]
                %663 = vst [vmem:[%s643 + $0x48] sm:$0xff] %v662
                %v664 = vld [vmem:[%s642 + $0x50] sm:$0xff]
                %665 = vst [vmem:[%s643 + $0x50] sm:$0xff] %v664
                %v666 = vld [vmem:[%s642 + $0x58] sm:$0xff]
                %667 = vst [vmem:[%s643 + $0x58] sm:$0xff] %v666
                %v668 = vld [vmem:[%s642 + $0x60] sm:$0xff]
                %669 = vst [vmem:[%s643 + $0x60] sm:$0xff] %v668
                %v670 = vld [vmem:[%s642 + $0x68] sm:$0xff]
                %671 = vst [vmem:[%s643 + $0x68] sm:$0xff] %v670
                %v672 = vld [vmem:[%s642 + $0x70] sm:$0xff]
                %673 = vst [vmem:[%s643 + $0x70] sm:$0xff] %v672
                %v674 = vld [vmem:[%s642 + $0x78] sm:$0xff]
                %675 = vst [vmem:[%s643 + $0x78] sm:$0xff] %v674
                %v676 = vld [vmem:[%s642 + $0x80] sm:$0xff]
                %677 = vst [vmem:[%s643 + $0x80] sm:$0xff] %v676
                %v678 = vld [vmem:[%s642 + $0x88] sm:$0xff]
                %679 = vst [vmem:[%s643 + $0x88] sm:$0xff] %v678
                %v680 = vld [vmem:[%s642 + $0x90] sm:$0xff]
                %681 = vst [vmem:[%s643 + $0x90] sm:$0xff] %v680
                %v682 = vld [vmem:[%s642 + $0x98] sm:$0xff]
                %683 = vst [vmem:[%s643 + $0x98] sm:$0xff] %v682
                %v684 = vld [vmem:[%s642 + $0xa0] sm:$0xff]
                %685 = vst [vmem:[%s643 + $0xa0] sm:$0xff] %v684
                %v686 = vld [vmem:[%s642 + $0xa8] sm:$0xff]
                %687 = vst [vmem:[%s643 + $0xa8] sm:$0xff] %v686
                %v688 = vld [vmem:[%s642 + $0xb0] sm:$0xff]
                %689 = vst [vmem:[%s643 + $0xb0] sm:$0xff] %v688
                %v690 = vld [vmem:[%s642 + $0xb8] sm:$0xff]
                %691 = vst [vmem:[%s643 + $0xb8] sm:$0xff] %v690
                %v692 = vld [vmem:[%s642 + $0xc0] sm:$0xff]
                %693 = vst [vmem:[%s643 + $0xc0] sm:$0xff] %v692
                %v694 = vld [vmem:[%s642 + $0xc8] sm:$0xff]
                %695 = vst [vmem:[%s643 + $0xc8] sm:$0xff] %v694
                %v696 = vld [vmem:[%s642 + $0xd0] sm:$0xff]
                %697 = vst [vmem:[%s643 + $0xd0] sm:$0xff] %v696
                %v698 = vld [vmem:[%s642 + $0xd8] sm:$0xff]
                %699 = vst [vmem:[%s643 + $0xd8] sm:$0xff] %v698
                %v700 = vld [vmem:[%s642 + $0xe0] sm:$0xff]
                %701 = vst [vmem:[%s643 + $0xe0] sm:$0xff] %v700
                %v702 = vld [vmem:[%s642 + $0xe8] sm:$0xff]
                %703 = vst [vmem:[%s643 + $0xe8] sm:$0xff] %v702
                %v704 = vld [vmem:[%s642 + $0xf0] sm:$0xff]
                %705 = vst [vmem:[%s643 + $0xf0] sm:$0xff] %v704
                %v706 = vld [vmem:[%s642 + $0xf8] sm:$0xff]
                %707 = vst [vmem:[%s643 + $0xf8] sm:$0xff] %v706
                %s708 = sadd.s32 1, %s641
                %p709 = scmp.ge.s32.totalorder %s708, %s634
                %s710 = scalar_select %p709, 0, %s708
                %s711 = smul.u32 %s710, 256
                %s712 = smul.u32 %s710, 256
                %s713 = scalar_lea.vmem %s614, %s711 [#allocation2]
                %s714 = scalar_lea.vmem %s625, %s712
              $region53: #{basic_conv2d.1} parent=47 // loop_footer
                %s638 = sadd.s32 %s636, 1
              $region54: #{basic_conv2d.1} parent=47 // loop_footer_branch
                %635 = sbr.rel target = $region50
              $region55: #{basic_conv2d.1} parent=47 // loop_exit
                _
              %s715 = sshrl.u32 %s621, 5
              %s716 = sand.u32 %s621, 31
              %s717 = smul.u32 %s715, 32
              %s718 = smul.u32 8, %s717
              %s719 = scalar_lea.vmem %s614, %s718 [#allocation2]
              %s720 = smul.u32 8, %s717
              %s721 = scalar_lea.vmem %s625, %s720
              // While loop
              $region56: #{basic_conv2d.1} parent=47 // loop_pre_header
                _
              $region57: #{basic_conv2d.1} parent=47 // loop_header
                %s723 = sphi 0, %s725
                %p724 = scmp.ge.s32.totalorder %s723, %s716
                %s728 = sphi 0, %s735
                %s729 = sphi %s719, %s738
                %s730 = sphi %s721, %s739
              $region58: #{basic_conv2d.1} parent=47 // loop_header_branch
                %727 = sbr.rel (%p724) target = $region62
              $region59: #{basic_conv2d.1} parent=47 // loop_body
                %v731 = vld [vmem:[%s729] sm:$0xff]
                %732 = vst [vmem:[%s730] sm:$0xff] %v731
                %s733 = sadd.s32 1, %s728
                %p734 = scmp.ge.s32.totalorder %s733, %s716
                %s735 = scalar_select %p734, 0, %s733
                %s736 = smul.u32 %s735, 8
                %s737 = smul.u32 %s735, 8
                %s738 = scalar_lea.vmem %s719, %s736 [#allocation2]
                %s739 = scalar_lea.vmem %s721, %s737
              $region60: #{basic_conv2d.1} parent=47 // loop_footer
                %s725 = sadd.s32 %s723, 1
              $region61: #{basic_conv2d.1} parent=47 // loop_footer_branch
                %722 = sbr.rel target = $region57
              $region62: #{basic_conv2d.1} parent=47 // loop_exit
                _
            $region48: #{basic_conv2d.1} parent=39 // pred_fallthru
              _
          $region40: #{basic_conv2d.1} parent=35 // pred_fallthru
            _
          %850 = vnop
        $region36: #{basic_conv2d.1} parent=31 // pred_fallthru
          _
      $region32: #{basic_conv2d.1} parent=5 // pred_fallthru
        _
      %p851 = scmp.le.s32.totalorder 2, %s9
      // Predicated region
      $region85: #{basic_conv2d.1} parent=5 // pred_check
        %p852 = pneg %p851
      $region86: #{basic_conv2d.1} parent=5 // pred_check_branch
        %854 = sbr.rel (%p852) target = $region88
      $region87: #{basic_conv2d.1} parent=5 // pred_region
        %s855 = ssub.s32 %s9, 2
        // Predicated region
        $region89: #{basic_conv2d.1} parent=87 // pred_check
          %p856 = pneg %p106
        $region90: #{basic_conv2d.1} parent=87 // pred_check_branch
          %858 = sbr.rel (%p856) target = $region92
        $region91: #{basic_conv2d.1} parent=87 // pred_region
          %s859 = sand.u32 %s91, 1
          %s860 = sand.u32 %s91, 1
          %s861 = smul.addr %s860, 256
          %s862 = scalar_lea.vmem [#allocation2], %s861
        $region92: #{basic_conv2d.1} parent=87 // pred_fallthru
          _
      $region88: #{basic_conv2d.1} parent=5 // pred_fallthru
        _
    $region6: #{basic_conv2d.1} parent=1 // loop_footer
      %s13 = sadd.s32 1, %s9
    $region7: #{basic_conv2d.1} parent=1 // loop_footer_branch
      %8 = sbr.rel target = $region3
    $region8: #{basic_conv2d.1} parent=1 // loop_exit
      _

</llo_original>
